<compile_context>
chip_gen: v7x
topology: tpu7x:2x2x1
jax: 0.10.0
libtpu: 0.0.40
codegen_flags: <defaults>
</compile_context>

<pallas_src>
import functools

import jax
import jax.numpy as jnp
from jax.experimental import pallas as pl
from jax.experimental.pallas import tpu as pltpu

F_PAD = 128             # lane-dense padded feature width
NODE_ALIGN = 128        # node-axis padding (A lane dim + bf16 sublane packing)
FUSED_MAX_NODES = 1024  # largest padded node count for the single-block path
TM = 512                # tiled path: destination rows per block
TK = 512                # tiled path: contraction (source-node) block


def _round_up(x, m):
    return (x + m - 1) // m * m


# ----------------------------- fused small-N path ----------------------------

def _gin_fused_kernel(eps_per_layer, relu_per_layer,
                      a_ref, dinv_ref, h_ref, w_ref, b_ref, out_ref):
    """All layers in one kernel; every operand resident in VMEM."""
    a = a_ref[...]                        # [Np, Np]   bf16, unnormalized 0/1
    dinv = dinv_ref[...]                  # [Np, 1]    f32, 1/in-degree
    h = h_ref[...]                        # [Np, F_PAD] bf16 running state
    for i, (eps, relu) in enumerate(zip(eps_per_layer, relu_per_layer)):
        # Mean aggregation: MXU bf16 matmul with f32 accumulate, then exact f32
        # per-row 1/deg scaling.
        neigh = jnp.dot(a, h, preferred_element_type=jnp.float32) * dinv
        hf = h.astype(jnp.float32)
        z = hf + neigh if eps == 0.0 else (1.0 + eps) * hf + neigh
        # Dropout(0.6) is identity at inference time.
        # TODO(synk): training-mode dropout -> pltpu.prng_seed/prng_random_bits.
        # TODO(synk): learn_eps=True would take eps as an SMEM scalar input.
        y = jnp.dot(z.astype(jnp.bfloat16), w_ref[i],
                    preferred_element_type=jnp.float32) + b_ref[i]
        if relu:
            y = jnp.maximum(y, 0.0)
        h = y.astype(jnp.bfloat16)        # bf16 residency between layers
    out_ref[...] = h.astype(out_ref.dtype)


def _gin_forward_fused(a_p, dinv_p, h_p, w_stack, b_stack, epsilons, relu_flags):
    n_pad = a_p.shape[0]
    n_layers = w_stack.shape[0]
    kernel = functools.partial(_gin_fused_kernel, epsilons, relu_flags)
    flops = n_layers * (2 * n_pad * n_pad * F_PAD + 2 * n_pad * F_PAD * F_PAD)
    bytes_accessed = (a_p.size * 2 + dinv_p.size * 4 + h_p.size * 2
                      + w_stack.size * 2 + b_stack.size * 4 + n_pad * F_PAD * 4)
    return pl.pallas_call(
        kernel,
        out_shape=jax.ShapeDtypeStruct((n_pad, F_PAD), jnp.float32),
        in_specs=[pl.BlockSpec(memory_space=pltpu.MemorySpace.VMEM)] * 5,
        out_specs=pl.BlockSpec(memory_space=pltpu.MemorySpace.VMEM),
        cost_estimate=pl.CostEstimate(flops=flops, transcendentals=0,
                                      bytes_accessed=bytes_accessed),
    )(a_p, dinv_p, h_p, w_stack, b_stack)


# --------------------------- tiled graph-scale path ---------------------------

def _gin_layer_tiled_kernel(eps, relu,
                            a_ref, dinv_ref, hsrc_ref, hself_ref, w_ref, b_ref,
                            out_ref, acc_ref):
    k = pl.program_id(1)

    @pl.when(k == 0)
    def _():
        acc_ref[...] = jnp.zeros_like(acc_ref)

    # Stream A in (TM, TK) bf16 tiles; accumulate neighbor-feature sums in f32.
    acc_ref[...] += jnp.dot(a_ref[...], hsrc_ref[...],
                            preferred_element_type=jnp.float32)

    @pl.when(k == pl.num_programs(1) - 1)
    def _():
        neigh = acc_ref[...] * dinv_ref[...]          # exact f32 mean scaling
        hf = hself_ref[...].astype(jnp.float32)
        z = hf + neigh if eps == 0.0 else (1.0 + eps) * hf + neigh
        y = jnp.dot(z.astype(jnp.bfloat16), w_ref[...],
                    preferred_element_type=jnp.float32) + b_ref[...]
        if relu:
            y = jnp.maximum(y, 0.0)
        out_ref[...] = y.astype(out_ref.dtype)


def _gin_layer_tiled(a_p, dinv_p, h_p, w_p, b_p, eps, relu, out_dtype):
    n_pad = a_p.shape[0]
    grid = (n_pad // TM, n_pad // TK)
    kernel = functools.partial(_gin_layer_tiled_kernel, eps, relu)
    flops = 2 * n_pad * n_pad * F_PAD + 2 * n_pad * F_PAD * F_PAD
    bytes_accessed = (a_p.size * 2 + dinv_p.size * 4 + 2 * h_p.size * 2
                      + w_p.size * 2 + b_p.size * 4 + n_pad * F_PAD * 4)
    # TODO(synk): for very sparse graphs at scale, scalar-prefetch a per-(i,k)
    #   nonzero-block bitmap (PrefetchScalarGridSpec) and wrap the A-tile matmul
    #   in pl.when(block_nonzero) to skip all-zero tiles.
    return pl.pallas_call(
        kernel,
        out_shape=jax.ShapeDtypeStruct((n_pad, F_PAD), out_dtype),
        grid=grid,
        in_specs=[
            pl.BlockSpec((TM, TK), lambda i, k: (i, k)),         # A tile
            pl.BlockSpec((TM, 1), lambda i, k: (i, 0)),          # 1/deg rows
            pl.BlockSpec((TK, F_PAD), lambda i, k: (k, 0)),      # h source block
            pl.BlockSpec((TM, F_PAD), lambda i, k: (i, 0)),      # h self block
            pl.BlockSpec((F_PAD, F_PAD), lambda i, k: (0, 0)),   # W (resident)
            pl.BlockSpec((1, F_PAD), lambda i, k: (0, 0)),       # b (resident)
        ],
        out_specs=pl.BlockSpec((TM, F_PAD), lambda i, k: (i, 0)),
        scratch_shapes=[pltpu.VMEM((TM, F_PAD), jnp.float32)],
        compiler_params=pltpu.CompilerParams(
            dimension_semantics=("parallel", "arbitrary")),
        cost_estimate=pl.CostEstimate(flops=flops, transcendentals=0,
                                      bytes_accessed=bytes_accessed),
    )(a_p, dinv_p, h_p, h_p, w_p, b_p)


# --------------------------------- forward ------------------------------------

@functools.partial(jax.jit, static_argnames=("epsilons",))
def gin_forward(adj, features, params, epsilons):
    """GIN forward (eval mode).

    adj:      [N, N] 0/1 adjacency, adj[v, u] = 1 iff edge u -> v (in-neighbor).
    features: [N, F_in] f32.
    params:   list of (W [F_in_i, F_out_i] f32, b [F_out_i] f32) per GINConv.
    epsilons: tuple of python floats (learn_eps=False -> compile-time consts).
    """
    n = features.shape[0]
    f_in = features.shape[1]
    n_layers = len(params)
    n_classes = params[-1][0].shape[1]
    relu_flags = tuple(i < n_layers - 1 for i in range(n_layers))
    epsilons = tuple(float(e) for e in epsilons)

    n_pad = _round_up(n, NODE_ALIGN)
    use_fused = n_pad <= FUSED_MAX_NODES
    if not use_fused:
        n_pad = _round_up(n_pad, max(TM, TK))

    # Host-side padding (traced once per shape under jit).
    adj01 = (adj != 0).astype(jnp.float32)
    a_p = jnp.zeros((n_pad, n_pad), jnp.float32).at[:n, :n].set(adj01)
    deg = jnp.sum(a_p, axis=1, keepdims=True)
    dinv_p = 1.0 / jnp.maximum(deg, 1.0)           # [n_pad, 1] f32, exact
    a_p = a_p.astype(jnp.bfloat16)                 # 0/1 values: exact in bf16
    h_p = jnp.zeros((n_pad, F_PAD), jnp.bfloat16).at[:n, :f_in].set(
        features.astype(jnp.bfloat16))

    # Zero-padded per-layer weights / biases at F_PAD lanes.
    w_pads, b_pads = [], []
    for w, b in params:
        w_pads.append(jnp.zeros((F_PAD, F_PAD), jnp.float32)
                      .at[:w.shape[0], :w.shape[1]].set(w).astype(jnp.bfloat16))
        b_pads.append(jnp.zeros((1, F_PAD), jnp.float32).at[0, :b.shape[0]].set(b))

    if use_fused:
        w_stack = jnp.stack(w_pads)                # [L, F_PAD, F_PAD] bf16
        b_stack = jnp.stack(b_pads)                # [L, 1, F_PAD] f32
        out_p = _gin_forward_fused(a_p, dinv_p, h_p, w_stack, b_stack,
                                   epsilons, relu_flags)
    else:
        h_cur = h_p
        for li in range(n_layers):
            out_dtype = jnp.float32 if li == n_layers - 1 else jnp.bfloat16
            h_cur = _gin_layer_tiled(a_p, dinv_p, h_cur, w_pads[li], b_pads[li],
                                     epsilons[li], relu_flags[li], out_dtype)
        out_p = h_cur

    # Padded rows only ever hold bias / ReLU(bias); slice them (and lane pad) off.
    return out_p[:n, :n_classes]


# -------------------------------- reference -----------------------------------

def gin_reference(adj, features, params, epsilons):
    """Pure-JAX f32 reference (module semantics at eval)."""
    adj01 = (adj != 0).astype(jnp.float32)
    deg = jnp.sum(adj01, axis=1, keepdims=True)
    a_norm = adj01 / jnp.maximum(deg, 1.0)
    h = features
    n_layers = len(params)
    for i, ((w, b), eps) in enumerate(zip(params, epsilons)):
        z = (1.0 + eps) * h + a_norm @ h
        h = z @ w + b
        if i < n_layers - 1:
            h = jnp.maximum(h, 0.0)
    return h


def init_linear(key, fan_in, fan_out):
    """Deterministic init mimicking torch.nn.Linear default (uniform +-1/sqrt(fan_in))."""
    kw, kb = jax.random.split(key)
    bound = 1.0 / float(fan_in) ** 0.5
    w = jax.random.uniform(kw, (fan_in, fan_out), jnp.float32, -bound, bound)
    b = jax.random.uniform(kb, (fan_out,), jnp.float32, -bound, bound)
    return w, b


if __name__ == "__main__":
    def build_case(key, n, in_feats, n_hidden, n_classes, n_layers, density):
        k_graph, k_feat, k_params = jax.random.split(key, 3)
        adj = (jax.random.uniform(k_graph, (n, n)) < density).astype(jnp.float32)
        features = jax.random.normal(k_feat, (n, in_feats), jnp.float32)
        layer_dims = ([(in_feats, n_hidden)]
                      + [(n_hidden, n_hidden)] * (n_layers - 1)
                      + [(n_hidden, n_classes)])
        keys = jax.random.split(k_params, len(layer_dims))
        params = [init_linear(k, fi, fo) for k, (fi, fo) in zip(keys, layer_dims)]
        epsilons = tuple(0.0 for _ in layer_dims)   # init_eps=0, learn_eps=False
        return adj, features, params, epsilons

    k1, k2 = jax.random.split(jax.random.PRNGKey(0))

    # Case 1: small citation-network-like sizes -> fused single-block path.
    N1, n_classes1 = 64, 8
    adj1, feats1, params1, eps1 = build_case(k1, N1, 16, 32, n_classes1, 2, 0.1)
    out1 = gin_forward(adj1, feats1, params1, eps1)
    jax.block_until_ready(out1)
    assert out1.shape == (N1, n_classes1)
    ref1 = gin_reference(adj1, feats1, params1, eps1)
    err1 = float(jnp.max(jnp.abs(out1 - ref1)))
    assert err1 < 0.2, f"fused path mismatch vs reference: {err1}"

    # Case 2: larger graph -> tiled / pipelined path (grid (3, 3) per layer).
    N2, n_classes2 = 1300, 8
    adj2, feats2, params2, eps2 = build_case(k2, N2, 16, 32, n_classes2, 2, 0.02)
    out2 = gin_forward(adj2, feats2, params2, eps2)
    jax.block_until_ready(out2)
    assert out2.shape == (N2, n_classes2)
    ref2 = gin_reference(adj2, feats2, params2, eps2)
    err2 = float(jnp.max(jnp.abs(out2 - ref2)))
    assert err2 < 0.2, f"tiled path mismatch vs reference: {err2}"

    print("KERNEL_OK")
</pallas_src>

<mosaic_0001>
module attributes {stable_mosaic.version = 11 : i64} {
  func.func @_gin_fused_kernel(%arg0: memref<128x128xbf16, #tpu.memory_space<vmem>>, %arg1: memref<128x1xf32, #tpu.memory_space<vmem>>, %arg2: memref<128x128xbf16, #tpu.memory_space<vmem>>, %arg3: memref<3x128x128xbf16, #tpu.memory_space<vmem>>, %arg4: memref<3x1x128xf32, #tpu.memory_space<vmem>>, %arg5: memref<128x128xf32, #tpu.memory_space<vmem>>) attributes {dimension_semantics = [], scalar_prefetch = 0 : i64, scratch_operands = 0 : i64, tpu.core_type = #tpu.core_type<tc>} {
    %c0 = arith.constant 0 : index
    %c0_0 = arith.constant 0 : index
    %0 = vector.load %arg0[%c0, %c0_0] : memref<128x128xbf16, #tpu.memory_space<vmem>>, vector<128x128xbf16>
    %c0_1 = arith.constant 0 : index
    %c0_2 = arith.constant 0 : index
    %1 = vector.load %arg1[%c0_1, %c0_2] : memref<128x1xf32, #tpu.memory_space<vmem>>, vector<128x1xf32>
    %c0_3 = arith.constant 0 : index
    %c0_4 = arith.constant 0 : index
    %2 = vector.load %arg2[%c0_3, %c0_4] : memref<128x128xbf16, #tpu.memory_space<vmem>>, vector<128x128xbf16>
    %cst = arith.constant dense<0.000000e+00> : vector<128x128xf32>
    %3 = tpu.matmul %0, %2, %cst {dimension_numbers = #tpu.dot_dimension_numbers<[1], [0], [0], [1], [0, 0, 1, 1], [], []>} : vector<128x128xbf16>, vector<128x128xbf16>, vector<128x128xf32> -> vector<128x128xf32>
    %4 = vector.broadcast %1 : vector<128x1xf32> to vector<128x128xf32>
    %5 = arith.mulf %3, %4 : vector<128x128xf32>
    %6 = arith.extf %2 : vector<128x128xbf16> to vector<128x128xf32>
    %7 = arith.addf %6, %5 : vector<128x128xf32>
    %8 = arith.truncf %7 : vector<128x128xf32> to vector<128x128xbf16>
    %c0_5 = arith.constant 0 : index
    %c0_6 = arith.constant 0 : index
    %c0_7 = arith.constant 0 : index
    %9 = vector.load %arg3[%c0_5, %c0_6, %c0_7] : memref<3x128x128xbf16, #tpu.memory_space<vmem>>, vector<1x128x128xbf16>
    %10 = vector.shape_cast %9 : vector<1x128x128xbf16> to vector<128x128xbf16>
    %cst_8 = arith.constant dense<0.000000e+00> : vector<128x128xf32>
    %11 = tpu.matmul %8, %10, %cst_8 {dimension_numbers = #tpu.dot_dimension_numbers<[1], [0], [0], [1], [0, 0, 1, 1], [], []>} : vector<128x128xbf16>, vector<128x128xbf16>, vector<128x128xf32> -> vector<128x128xf32>
    %c0_9 = arith.constant 0 : index
    %c0_10 = arith.constant 0 : index
    %c0_11 = arith.constant 0 : index
    %12 = vector.load %arg4[%c0_9, %c0_10, %c0_11] : memref<3x1x128xf32, #tpu.memory_space<vmem>>, vector<1x1x128xf32>
    %13 = vector.shape_cast %12 : vector<1x1x128xf32> to vector<1x128xf32>
    %14 = vector.broadcast %13 : vector<1x128xf32> to vector<128x128xf32>
    %15 = arith.addf %11, %14 : vector<128x128xf32>
    %cst_12 = arith.constant 0.000000e+00 : f32
    %16 = vector.broadcast %cst_12 : f32 to vector<128x128xf32>
    %17 = arith.maximumf %15, %16 : vector<128x128xf32>
    %18 = arith.truncf %17 : vector<128x128xf32> to vector<128x128xbf16>
    %cst_13 = arith.constant dense<0.000000e+00> : vector<128x128xf32>
    %19 = tpu.matmul %0, %18, %cst_13 {dimension_numbers = #tpu.dot_dimension_numbers<[1], [0], [0], [1], [0, 0, 1, 1], [], []>} : vector<128x128xbf16>, vector<128x128xbf16>, vector<128x128xf32> -> vector<128x128xf32>
    %20 = vector.broadcast %1 : vector<128x1xf32> to vector<128x128xf32>
    %21 = arith.mulf %19, %20 : vector<128x128xf32>
    %22 = arith.extf %18 : vector<128x128xbf16> to vector<128x128xf32>
    %23 = arith.addf %22, %21 : vector<128x128xf32>
    %24 = arith.truncf %23 : vector<128x128xf32> to vector<128x128xbf16>
    %c1 = arith.constant 1 : index
    %c0_14 = arith.constant 0 : index
    %c0_15 = arith.constant 0 : index
    %25 = vector.load %arg3[%c1, %c0_14, %c0_15] : memref<3x128x128xbf16, #tpu.memory_space<vmem>>, vector<1x128x128xbf16>
    %26 = vector.shape_cast %25 : vector<1x128x128xbf16> to vector<128x128xbf16>
    %cst_16 = arith.constant dense<0.000000e+00> : vector<128x128xf32>
    %27 = tpu.matmul %24, %26, %cst_16 {dimension_numbers = #tpu.dot_dimension_numbers<[1], [0], [0], [1], [0, 0, 1, 1], [], []>} : vector<128x128xbf16>, vector<128x128xbf16>, vector<128x128xf32> -> vector<128x128xf32>
    %c1_17 = arith.constant 1 : index
    %c0_18 = arith.constant 0 : index
    %c0_19 = arith.constant 0 : index
    %28 = vector.load %arg4[%c1_17, %c0_18, %c0_19] : memref<3x1x128xf32, #tpu.memory_space<vmem>>, vector<1x1x128xf32>
    %29 = vector.shape_cast %28 : vector<1x1x128xf32> to vector<1x128xf32>
    %30 = vector.broadcast %29 : vector<1x128xf32> to vector<128x128xf32>
    %31 = arith.addf %27, %30 : vector<128x128xf32>
    %cst_20 = arith.constant 0.000000e+00 : f32
    %32 = vector.broadcast %cst_20 : f32 to vector<128x128xf32>
    %33 = arith.maximumf %31, %32 : vector<128x128xf32>
    %34 = arith.truncf %33 : vector<128x128xf32> to vector<128x128xbf16>
    %cst_21 = arith.constant dense<0.000000e+00> : vector<128x128xf32>
    %35 = tpu.matmul %0, %34, %cst_21 {dimension_numbers = #tpu.dot_dimension_numbers<[1], [0], [0], [1], [0, 0, 1, 1], [], []>} : vector<128x128xbf16>, vector<128x128xbf16>, vector<128x128xf32> -> vector<128x128xf32>
    %36 = vector.broadcast %1 : vector<128x1xf32> to vector<128x128xf32>
    %37 = arith.mulf %35, %36 : vector<128x128xf32>
    %38 = arith.extf %34 : vector<128x128xbf16> to vector<128x128xf32>
    %39 = arith.addf %38, %37 : vector<128x128xf32>
    %40 = arith.truncf %39 : vector<128x128xf32> to vector<128x128xbf16>
    %c2 = arith.constant 2 : index
    %c0_22 = arith.constant 0 : index
    %c0_23 = arith.constant 0 : index
    %41 = vector.load %arg3[%c2, %c0_22, %c0_23] : memref<3x128x128xbf16, #tpu.memory_space<vmem>>, vector<1x128x128xbf16>
    %42 = vector.shape_cast %41 : vector<1x128x128xbf16> to vector<128x128xbf16>
    %cst_24 = arith.constant dense<0.000000e+00> : vector<128x128xf32>
    %43 = tpu.matmul %40, %42, %cst_24 {dimension_numbers = #tpu.dot_dimension_numbers<[1], [0], [0], [1], [0, 0, 1, 1], [], []>} : vector<128x128xbf16>, vector<128x128xbf16>, vector<128x128xf32> -> vector<128x128xf32>
    %c2_25 = arith.constant 2 : index
    %c0_26 = arith.constant 0 : index
    %c0_27 = arith.constant 0 : index
    %44 = vector.load %arg4[%c2_25, %c0_26, %c0_27] : memref<3x1x128xf32, #tpu.memory_space<vmem>>, vector<1x1x128xf32>
    %45 = vector.shape_cast %44 : vector<1x1x128xf32> to vector<1x128xf32>
    %46 = vector.broadcast %45 : vector<1x128xf32> to vector<128x128xf32>
    %47 = arith.addf %43, %46 : vector<128x128xf32>
    %48 = arith.truncf %47 : vector<128x128xf32> to vector<128x128xbf16>
    %49 = arith.extf %48 : vector<128x128xbf16> to vector<128x128xf32>
    %c0_28 = arith.constant 0 : index
    %c0_29 = arith.constant 0 : index
    %50 = vector.load %arg5[%c0_28, %c0_29] : memref<128x128xf32, #tpu.memory_space<vmem>>, vector<128x128xf32>
    tpu.vector_store %arg5[%c0_28, %c0_29], %49 {strides = array<i32>} : memref<128x128xf32, #tpu.memory_space<vmem>>, vector<128x128xf32>,
    return
  }
}

</mosaic_0001>

<llo_original>
// kernel: gin_forward.1
$region0: #{gin_forward.1}
  #allocation0 [shape = 'u32[]', space=smem, size = 0x4, offset = 0x4, fixed_abs, tag = 'smem constant byte address 0x4 - core index']
  #allocation1 [shape = 'u32[144,128]{1,0:T(1,128)}', space=vmem, size = 0x12000, scoped, tag = 'internal scratch']
  %s0 = inlined_call_operand.vmem [shape: bf16[128,128], index: 0, kind: input, shape index: {}]
  %s1 = inlined_call_operand.vmem [shape: f32[128,1], index: 1, kind: input, shape index: {}]
  %s2 = inlined_call_operand.vmem [shape: bf16[128,128], index: 2, kind: input, shape index: {}]
  %s3 = inlined_call_operand.vmem [shape: bf16[3,128,128], index: 3, kind: input, shape index: {}]
  %s4 = inlined_call_operand.vmem [shape: f32[3,1,128], index: 4, kind: input, shape index: {}]
  %s5 = inlined_call_operand.vmem [shape: f32[128,128], index: 5, kind: output, shape index: {}]
  %s6 = sld [smem:[#allocation0]]
  $region30: #{gin_forward.1} parent=0
    _
  %s8 = ssub.s32 1, %s6
  %s9 = scalar_select 0, %s8, %s6
  // Predicated region
  $region2: #{gin_forward.1} parent=0 // pred_check
    _
  $region3: #{gin_forward.1} parent=0 // pred_check_branch
    %11 = sbr.rel (0) target = $region5
  $region4: #{gin_forward.1} parent=0 // pred_region
    _
  $region5: #{gin_forward.1} parent=0 // pred_fallthru
    _
  // Predicated region
  $region6: #{gin_forward.1} parent=0 // pred_check
    _
  $region7: #{gin_forward.1} parent=0 // pred_check_branch
    %13 = sbr.rel (0) target = $region9
  $region8: #{gin_forward.1} parent=0 // pred_region
    _
  $region9: #{gin_forward.1} parent=0 // pred_fallthru
    _
  // Predicated region
  $region10: #{gin_forward.1} parent=0 // pred_check
    _
  $region11: #{gin_forward.1} parent=0 // pred_check_branch
    %15 = sbr.rel (0) target = $region13
  $region12: #{gin_forward.1} parent=0 // pred_region
    _
  $region13: #{gin_forward.1} parent=0 // pred_fallthru
    _
  // Predicated region
  $region14: #{gin_forward.1} parent=0 // pred_check
    _
  $region15: #{gin_forward.1} parent=0 // pred_check_branch
    %17 = sbr.rel (0) target = $region17
  $region16: #{gin_forward.1} parent=0 // pred_region
    _
  $region17: #{gin_forward.1} parent=0 // pred_fallthru
    _
  // Predicated region
  $region18: #{gin_forward.1} parent=0 // pred_check
    _
  $region19: #{gin_forward.1} parent=0 // pred_check_branch
    %19 = sbr.rel (0) target = $region21
  $region20: #{gin_forward.1} parent=0 // pred_region
    _
  $region21: #{gin_forward.1} parent=0 // pred_fallthru
    _
  %v21 = vld [vmem:[%s0] sm:$0xf]
  %v22 = vld [vmem:[%s0 + $0x4] sm:$0xf]
  %v23 = vld [vmem:[%s0 + $0x8] sm:$0xf]
  %v24 = vld [vmem:[%s0 + $0xc] sm:$0xf]
  %v25 = vld [vmem:[%s0 + $0x10] sm:$0xf]
  %v26 = vld [vmem:[%s0 + $0x14] sm:$0xf]
  %v27 = vld [vmem:[%s0 + $0x18] sm:$0xf]
  %v28 = vld [vmem:[%s0 + $0x1c] sm:$0xf]
  %v29 = vld [vmem:[%s0 + $0x20] sm:$0xf]
  %v30 = vld [vmem:[%s0 + $0x24] sm:$0xf]
  %v31 = vld [vmem:[%s0 + $0x28] sm:$0xf]
  %v32 = vld [vmem:[%s0 + $0x2c] sm:$0xf]
  %v33 = vld [vmem:[%s0 + $0x30] sm:$0xf]
  %v34 = vld [vmem:[%s0 + $0x34] sm:$0xf]
  %v35 = vld [vmem:[%s0 + $0x38] sm:$0xf]
  %v36 = vld [vmem:[%s0 + $0x3c] sm:$0xf]
  %v37 = vld [vmem:[%s1] sm:$0xff]
  %v38 = vld [vmem:[%s1 + $0x8] sm:$0xff]
  %v39 = vld [vmem:[%s1 + $0x10] sm:$0xff]
  %v40 = vld [vmem:[%s1 + $0x18] sm:$0xff]
  %v41 = vld [vmem:[%s1 + $0x20] sm:$0xff]
  %v42 = vld [vmem:[%s1 + $0x28] sm:$0xff]
  %v43 = vld [vmem:[%s1 + $0x30] sm:$0xff]
  %v44 = vld [vmem:[%s1 + $0x38] sm:$0xff]
  %v45 = vld [vmem:[%s1 + $0x40] sm:$0xff]
  %v46 = vld [vmem:[%s1 + $0x48] sm:$0xff]
  %v47 = vld [vmem:[%s1 + $0x50] sm:$0xff]
  %v48 = vld [vmem:[%s1 + $0x58] sm:$0xff]
  %v49 = vld [vmem:[%s1 + $0x60] sm:$0xff]
  %v50 = vld [vmem:[%s1 + $0x68] sm:$0xff]
  %v51 = vld [vmem:[%s1 + $0x70] sm:$0xff]
  %v52 = vld [vmem:[%s1 + $0x78] sm:$0xff]
  %v53 = vld [vmem:[%s2] sm:$0xf]
  %v54 = vld [vmem:[%s2 + $0x4] sm:$0xf]
  %v55 = vld [vmem:[%s2 + $0x8] sm:$0xf]
  %v56 = vld [vmem:[%s2 + $0xc] sm:$0xf]
  %v57 = vld [vmem:[%s2 + $0x10] sm:$0xf]
  %v58 = vld [vmem:[%s2 + $0x14] sm:$0xf]
  %v59 = vld [vmem:[%s2 + $0x18] sm:$0xf]
  %v60 = vld [vmem:[%s2 + $0x1c] sm:$0xf]
  %v61 = vld [vmem:[%s2 + $0x20] sm:$0xf]
  %v62 = vld [vmem:[%s2 + $0x24] sm:$0xf]
  %v63 = vld [vmem:[%s2 + $0x28] sm:$0xf]
  %v64 = vld [vmem:[%s2 + $0x2c] sm:$0xf]
  %v65 = vld [vmem:[%s2 + $0x30] sm:$0xf]
  %v66 = vld [vmem:[%s2 + $0x34] sm:$0xf]
  %v67 = vld [vmem:[%s2 + $0x38] sm:$0xf]
  %v68 = vld [vmem:[%s2 + $0x3c] sm:$0xf]
  %v85 = vunpack.c.l.b16 %v21
  %v86 = vunpack.c.l.b16 %v22
  %v87 = vunpack.c.l.b16 %v23
  %v88 = vunpack.c.l.b16 %v24
  %v89 = vunpack.c.l.b16 %v25
  %v90 = vunpack.c.l.b16 %v26
  %v91 = vunpack.c.l.b16 %v27
  %v92 = vunpack.c.l.b16 %v28
  %v93 = vunpack.c.l.b16 %v29
  %v94 = vunpack.c.l.b16 %v30
  %v95 = vunpack.c.l.b16 %v31
  %v96 = vunpack.c.l.b16 %v32
  %v97 = vunpack.c.l.b16 %v33
  %v98 = vunpack.c.l.b16 %v34
  %v99 = vunpack.c.l.b16 %v35
  %v100 = vunpack.c.l.b16 %v36
  %v101 = vpack.c.b16 %v86, %v85
  %v102 = vpack.c.b16 %v88, %v87
  %v103 = vpack.c.b16 %v90, %v89
  %v104 = vpack.c.b16 %v92, %v91
  %v105 = vpack.c.b16 %v94, %v93
  %v106 = vpack.c.b16 %v96, %v95
  %v107 = vpack.c.b16 %v98, %v97
  %v108 = vpack.c.b16 %v100, %v99
  %v133 = vunpack.c.l.b16 %v53
  %v134 = vunpack.c.l.b16 %v54
  %v135 = vunpack.c.l.b16 %v55
  %v136 = vunpack.c.l.b16 %v56
  %v137 = vunpack.c.l.b16 %v57
  %v138 = vunpack.c.l.b16 %v58
  %v139 = vunpack.c.l.b16 %v59
  %v140 = vunpack.c.l.b16 %v60
  %v141 = vunpack.c.l.b16 %v61
  %v142 = vunpack.c.l.b16 %v62
  %v143 = vunpack.c.l.b16 %v63
  %v144 = vunpack.c.l.b16 %v64
  %v145 = vunpack.c.l.b16 %v65
  %v146 = vunpack.c.l.b16 %v66
  %v147 = vunpack.c.l.b16 %v67
  %v148 = vunpack.c.l.b16 %v68
  %v149 = vpack.c.b16 %v134, %v133
  %v150 = vpack.c.b16 %v136, %v135
  %v151 = vpack.c.b16 %v138, %v137
  %v152 = vpack.c.b16 %v140, %v139
  %v153 = vpack.c.b16 %v142, %v141
  %v154 = vpack.c.b16 %v144, %v143
  %v155 = vpack.c.b16 %v146, %v145
  %v156 = vpack.c.b16 %v148, %v147
  %165 = vmatprep.subr.bf16.mxu0 0
  %166 = vmatpush1.bf16.msra.mxu0 %v149
  %167 = vmatprep.subr.bf16.mxu0 0
  %168 = vmatpush1.bf16.msra.mxu0 %v150
  %169 = vmatprep.subr.bf16.mxu0 0
  %170 = vmatpush1.bf16.msra.mxu0 %v151
  %171 = vmatprep.subr.bf16.mxu0 0
  %172 = vmatpush1.bf16.msra.mxu0 %v152
  %173 = vmatprep.subr.bf16.mxu0 0
  %174 = vmatpush1.bf16.msra.mxu0 %v153
  %175 = vmatprep.subr.bf16.mxu0 0
  %176 = vmatpush1.bf16.msra.mxu0 %v154
  %177 = vmatprep.subr.bf16.mxu0 0
  %178 = vmatpush1.bf16.msra.mxu0 %v155
  %179 = vmatprep.subr.bf16.mxu0 0
  %180 = vmatpush1.bf16.msra.mxu0 %v156
  %181 = vmatprep.subr.bf16.mxu0 0
  %182 = vmatpush1.bf16.msra.mxu0 0
  %183 = vmatprep.subr.bf16.mxu0 0
  %184 = vmatpush1.bf16.msra.mxu0 0
  %185 = vmatprep.subr.bf16.mxu0 0
  %186 = vmatpush1.bf16.msra.mxu0 0
  %187 = vmatprep.subr.bf16.mxu0 0
  %188 = vmatpush1.bf16.msra.mxu0 0
  %189 = vmatprep.subr.bf16.mxu0 0
  %190 = vmatpush1.bf16.msra.mxu0 0
  %191 = vmatprep.subr.bf16.mxu0 0
  %192 = vmatpush1.bf16.msra.mxu0 0
  %193 = vmatprep.subr.bf16.mxu0 0
  %194 = vmatpush1.bf16.msra.mxu0 0
  %195 = vmatprep.subr.bf16.mxu0 0
  %196 = vmatpush1.bf16.msra.mxu0 0
  %197 = vmatprep.mubr.bf16.mxu0 0
  %198 = vmatmul.mubr.bf16.gmra.mrb[0].mxu0 %v101
  %v199 = vpop.f32.mrb[0].mxu0
  %v200 = vadd.f32 0.0, %v199
  %v201 = vpop.f32.mrb[0].mxu0
  %v202 = vpop.f32.mrb[0].mxu0
  %v203 = vadd.f32 0.0, %v202
  %v204 = vpop.f32.mrb[0].mxu0
  %205 = vmatprep.mubr.bf16.mxu0 0
  %206 = vmatmul.mubr.bf16.gmra.mrb[0].mxu0 %v102
  %v207 = vpop.f32.mrb[0].mxu0
  %v208 = vadd.f32 0.0, %v207
  %v209 = vpop.f32.mrb[0].mxu0
  %v210 = vpop.f32.mrb[0].mxu0
  %v211 = vadd.f32 0.0, %v210
  %v212 = vpop.f32.mrb[0].mxu0
  %213 = vmatprep.mubr.bf16.mxu0 0
  %214 = vmatmul.mubr.bf16.gmra.mrb[0].mxu0 %v103
  %v215 = vpop.f32.mrb[0].mxu0
  %v216 = vadd.f32 0.0, %v215
  %v217 = vpop.f32.mrb[0].mxu0
  %v218 = vpop.f32.mrb[0].mxu0
  %v219 = vadd.f32 0.0, %v218
  %v220 = vpop.f32.mrb[0].mxu0
  %221 = vmatprep.mubr.bf16.mxu0 0
  %222 = vmatmul.mubr.bf16.gmra.mrb[0].mxu0 %v104
  %v223 = vpop.f32.mrb[0].mxu0
  %v224 = vadd.f32 0.0, %v223
  %v225 = vpop.f32.mrb[0].mxu0
  %v226 = vpop.f32.mrb[0].mxu0
  %v227 = vadd.f32 0.0, %v226
  %v228 = vpop.f32.mrb[0].mxu0
  %229 = vmatprep.mubr.bf16.mxu0 0
  %230 = vmatmul.mubr.bf16.gmra.mrb[0].mxu0 %v105
  %v231 = vpop.f32.mrb[0].mxu0
  %v232 = vadd.f32 0.0, %v231
  %v233 = vpop.f32.mrb[0].mxu0
  %v234 = vpop.f32.mrb[0].mxu0
  %v235 = vadd.f32 0.0, %v234
  %v236 = vpop.f32.mrb[0].mxu0
  %237 = vmatprep.mubr.bf16.mxu0 0
  %238 = vmatmul.mubr.bf16.gmra.mrb[0].mxu0 %v106
  %v239 = vpop.f32.mrb[0].mxu0
  %v240 = vadd.f32 0.0, %v239
  %v241 = vpop.f32.mrb[0].mxu0
  %v242 = vpop.f32.mrb[0].mxu0
  %v243 = vadd.f32 0.0, %v242
  %v244 = vpop.f32.mrb[0].mxu0
  %245 = vmatprep.mubr.bf16.mxu0 0
  %246 = vmatmul.mubr.bf16.gmra.mrb[0].mxu0 %v107
  %v247 = vpop.f32.mrb[0].mxu0
  %v248 = vadd.f32 0.0, %v247
  %v249 = vpop.f32.mrb[0].mxu0
  %v250 = vpop.f32.mrb[0].mxu0
  %v251 = vadd.f32 0.0, %v250
  %v252 = vpop.f32.mrb[0].mxu0
  %253 = vmatprep.mubr.bf16.mxu0 0
  %254 = vmatmul.mubr.bf16.gmra.mrb[0].mxu0 %v108
  %v255 = vpop.f32.mrb[0].mxu0
  %v256 = vadd.f32 0.0, %v255
  %v257 = vpop.f32.mrb[0].mxu0
  %v258 = vpop.f32.mrb[0].mxu0
  %v259 = vadd.f32 0.0, %v258
  %v260 = vpop.f32.mrb[0].mxu0
  %261 = vdwg.mxu0
  %263 = vset.pattern.permute.xlu0 0
  %264 = vperm.xlu0 %263, %v37
  %v265 = vpop.permute.xlu0 %264
  %268 = vset.pattern.permute.xlu0 0
  %269 = vperm.xlu0 %268, %v38
  %v270 = vpop.permute.xlu0 %269
  %273 = vset.pattern.permute.xlu0 0
  %274 = vperm.xlu0 %273, %v39
  %v275 = vpop.permute.xlu0 %274
  %278 = vset.pattern.permute.xlu0 0
  %279 = vperm.xlu0 %278, %v40
  %v280 = vpop.permute.xlu0 %279
  %283 = vset.pattern.permute.xlu0 0
  %284 = vperm.xlu0 %283, %v41
  %v285 = vpop.permute.xlu0 %284
  %288 = vset.pattern.permute.xlu0 0
  %289 = vperm.xlu0 %288, %v42
  %v290 = vpop.permute.xlu0 %289
  %293 = vset.pattern.permute.xlu0 0
  %294 = vperm.xlu0 %293, %v43
  %v295 = vpop.permute.xlu0 %294
  %298 = vset.pattern.permute.xlu0 0
  %299 = vperm.xlu0 %298, %v44
  %v300 = vpop.permute.xlu0 %299
  %303 = vset.pattern.permute.xlu0 0
  %304 = vperm.xlu0 %303, %v45
  %v305 = vpop.permute.xlu0 %304
  %308 = vset.pattern.permute.xlu0 0
  %309 = vperm.xlu0 %308, %v46
  %v310 = vpop.permute.xlu0 %309
  %313 = vset.pattern.permute.xlu0 0
  %314 = vperm.xlu0 %313, %v47
  %v315 = vpop.permute.xlu0 %314
  %318 = vset.pattern.permute.xlu0 0
  %319 = vperm.xlu0 %318, %v48
  %v320 = vpop.permute.xlu0 %319
  %323 = vset.pattern.permute.xlu0 0
  %324 = vperm.xlu0 %323, %v49
  %v325 = vpop.permute.xlu0 %324
  %328 = vset.pattern.permute.xlu0 0
  %329 = vperm.xlu0 %328, %v50
  %v330 = vpop.permute.xlu0 %329
  %333 = vset.pattern.permute.xlu0 0
  %334 = vperm.xlu0 %333, %v51
  %v335 = vpop.permute.xlu0 %334
  %338 = vset.pattern.permute.xlu0 0
  %339 = vperm.xlu0 %338, %v52
  %v340 = vpop.permute.xlu0 %339
  %v342 = vmul.f32 %v200, %v265
  %v343 = vmul.f32 %v203, %v270
  %v344 = vmul.f32 %v208, %v275
  %v345 = vmul.f32 %v211, %v280
  %v346 = vmul.f32 %v216, %v285
  %v347 = vmul.f32 %v219, %v290
  %v348 = vmul.f32 %v224, %v295
  %v349 = vmul.f32 %v227, %v300
  %v350 = vmul.f32 %v232, %v305
  %v351 = vmul.f32 %v235, %v310
  %v352 = vmul.f32 %v240, %v315
  %v353 = vmul.f32 %v243, %v320
  %v354 = vmul.f32 %v248, %v325
  %v355 = vmul.f32 %v251, %v330
  %v356 = vmul.f32 %v256, %v335
  %v357 = vmul.f32 %v259, %v340
  %v358 = vunpack.c.l.bf16 %v53
  %v359 = vunpack.c.l.bf16 %v54
  %v360 = vunpack.c.l.bf16 %v55
  %v361 = vunpack.c.l.bf16 %v56
  %v362 = vunpack.c.l.bf16 %v57
  %v363 = vunpack.c.l.bf16 %v58
  %v364 = vunpack.c.l.bf16 %v59
  %v365 = vunpack.c.l.bf16 %v60
  %v366 = vunpack.c.l.bf16 %v61
  %v367 = vunpack.c.l.bf16 %v62
  %v368 = vunpack.c.l.bf16 %v63
  %v369 = vunpack.c.l.bf16 %v64
  %v370 = vunpack.c.l.bf16 %v65
  %v371 = vunpack.c.l.bf16 %v66
  %v372 = vunpack.c.l.bf16 %v67
  %v373 = vunpack.c.l.bf16 %v68
  %v374 = vadd.f32 %v358, %v342
  %v375 = vadd.f32 %v359, %v343
  %v376 = vadd.f32 %v360, %v344
  %v377 = vadd.f32 %v361, %v345
  %v378 = vadd.f32 %v362, %v346
  %v379 = vadd.f32 %v363, %v347
  %v380 = vadd.f32 %v364, %v348
  %v381 = vadd.f32 %v365, %v349
  %v382 = vadd.f32 %v366, %v350
  %v383 = vadd.f32 %v367, %v351
  %v384 = vadd.f32 %v368, %v352
  %v385 = vadd.f32 %v369, %v353
  %v386 = vadd.f32 %v370, %v354
  %v387 = vadd.f32 %v371, %v355
  %v388 = vadd.f32 %v372, %v356
  %v389 = vadd.f32 %v373, %v357
  %v390 = vpack.c.bf16 %v375, %v374
  %v391 = vpack.c.bf16 %v377, %v376
  %v392 = vpack.c.bf16 %v379, %v378
  %v393 = vpack.c.bf16 %v381, %v380
  %v394 = vpack.c.bf16 %v383, %v382
  %v395 = vpack.c.bf16 %v385, %v384
  %v396 = vpack.c.bf16 %v387, %v386
  %v397 = vpack.c.bf16 %v389, %v388
  %v398 = vld [vmem:[%s3] sm:$0xf]
  %v399 = vld [vmem:[%s3 + $0x4] sm:$0xf]
  %v400 = vld [vmem:[%s3 + $0x8] sm:$0xf]
  %v401 = vld [vmem:[%s3 + $0xc] sm:$0xf]
  %v402 = vld [vmem:[%s3 + $0x10] sm:$0xf]
  %v403 = vld [vmem:[%s3 + $0x14] sm:$0xf]
  %v404 = vld [vmem:[%s3 + $0x18] sm:$0xf]
  %v405 = vld [vmem:[%s3 + $0x1c] sm:$0xf]
  %v406 = vld [vmem:[%s3 + $0x20] sm:$0xf]
  %v407 = vld [vmem:[%s3 + $0x24] sm:$0xf]
  %v408 = vld [vmem:[%s3 + $0x28] sm:$0xf]
  %v409 = vld [vmem:[%s3 + $0x2c] sm:$0xf]
  %v410 = vld [vmem:[%s3 + $0x30] sm:$0xf]
  %v411 = vld [vmem:[%s3 + $0x34] sm:$0xf]
  %v412 = vld [vmem:[%s3 + $0x38] sm:$0xf]
  %v413 = vld [vmem:[%s3 + $0x3c] sm:$0xf]
  %v414 = vld [vmem:[%s4] sm:$0x1]
  %v416 = vlaneseq
  %v417 = vshrl.u32 %v416, 7
  %v418 = vsub.s32 0, %v417
  %v419 = vrot.slane %v414, %v418
  %v437 = vunpack.c.l.b16 %v398
  %v438 = vunpack.c.l.b16 %v399
  %v439 = vunpack.c.l.b16 %v400
  %v440 = vunpack.c.l.b16 %v401
  %v441 = vunpack.c.l.b16 %v402
  %v442 = vunpack.c.l.b16 %v403
  %v443 = vunpack.c.l.b16 %v404
  %v444 = vunpack.c.l.b16 %v405
  %v445 = vunpack.c.l.b16 %v406
  %v446 = vunpack.c.l.b16 %v407
  %v447 = vunpack.c.l.b16 %v408
  %v448 = vunpack.c.l.b16 %v409
  %v449 = vunpack.c.l.b16 %v410
  %v450 = vunpack.c.l.b16 %v411
  %v451 = vunpack.c.l.b16 %v412
  %v452 = vunpack.c.l.b16 %v413
  %v453 = vpack.c.b16 %v438, %v437
  %v454 = vpack.c.b16 %v440, %v439
  %v455 = vpack.c.b16 %v442, %v441
  %v456 = vpack.c.b16 %v444, %v443
  %v457 = vpack.c.b16 %v446, %v445
  %v458 = vpack.c.b16 %v448, %v447
  %v459 = vpack.c.b16 %v450, %v449
  %v460 = vpack.c.b16 %v452, %v451
  %469 = vmatprep.subr.bf16.mxu0 0
  %470 = vmatpush1.bf16.msra.mxu0 %v453
  %471 = vmatprep.subr.bf16.mxu0 0
  %472 = vmatpush1.bf16.msra.mxu0 %v454
  %473 = vmatprep.subr.bf16.mxu0 0
  %474 = vmatpush1.bf16.msra.mxu0 %v455
  %475 = vmatprep.subr.bf16.mxu0 0
  %476 = vmatpush1.bf16.msra.mxu0 %v456
  %477 = vmatprep.subr.bf16.mxu0 0
  %478 = vmatpush1.bf16.msra.mxu0 %v457
  %479 = vmatprep.subr.bf16.mxu0 0
  %480 = vmatpush1.bf16.msra.mxu0 %v458
  %481 = vmatprep.subr.bf16.mxu0 0
  %482 = vmatpush1.bf16.msra.mxu0 %v459
  %483 = vmatprep.subr.bf16.mxu0 0
  %484 = vmatpush1.bf16.msra.mxu0 %v460
  %485 = vmatprep.subr.bf16.mxu0 0
  %486 = vmatpush1.bf16.msra.mxu0 0
  %487 = vmatprep.subr.bf16.mxu0 0
  %488 = vmatpush1.bf16.msra.mxu0 0
  %489 = vmatprep.subr.bf16.mxu0 0
  %490 = vmatpush1.bf16.msra.mxu0 0
  %491 = vmatprep.subr.bf16.mxu0 0
  %492 = vmatpush1.bf16.msra.mxu0 0
  %493 = vmatprep.subr.bf16.mxu0 0
  %494 = vmatpush1.bf16.msra.mxu0 0
  %495 = vmatprep.subr.bf16.mxu0 0
  %496 = vmatpush1.bf16.msra.mxu0 0
  %497 = vmatprep.subr.bf16.mxu0 0
  %498 = vmatpush1.bf16.msra.mxu0 0
  %499 = vmatprep.subr.bf16.mxu0 0
  %500 = vmatpush1.bf16.msra.mxu0 0
  %501 = vmatprep.mubr.bf16.mxu0 0
  %502 = vmatmul.mubr.bf16.gmra.mrb[0].mxu0 %v390
  %v503 = vpop.f32.mrb[0].mxu0
  %v504 = vadd.f32 %v419, %v503
  %v505 = vpop.f32.mrb[0].mxu0
  %v506 = vpop.f32.mrb[0].mxu0
  %v507 = vadd.f32 %v419, %v506
  %v508 = vpop.f32.mrb[0].mxu0
  %509 = vmatprep.mubr.bf16.mxu0 0
  %510 = vmatmul.mubr.bf16.gmra.mrb[0].mxu0 %v391
  %v511 = vpop.f32.mrb[0].mxu0
  %v512 = vadd.f32 %v419, %v511
  %v513 = vpop.f32.mrb[0].mxu0
  %v514 = vpop.f32.mrb[0].mxu0
  %v515 = vadd.f32 %v419, %v514
  %v516 = vpop.f32.mrb[0].mxu0
  %517 = vmatprep.mubr.bf16.mxu0 0
  %518 = vmatmul.mubr.bf16.gmra.mrb[0].mxu0 %v392
  %v519 = vpop.f32.mrb[0].mxu0
  %v520 = vadd.f32 %v419, %v519
  %v521 = vpop.f32.mrb[0].mxu0
  %v522 = vpop.f32.mrb[0].mxu0
  %v523 = vadd.f32 %v419, %v522
  %v524 = vpop.f32.mrb[0].mxu0
  %525 = vmatprep.mubr.bf16.mxu0 0
  %526 = vmatmul.mubr.bf16.gmra.mrb[0].mxu0 %v393
  %v527 = vpop.f32.mrb[0].mxu0
  %v528 = vadd.f32 %v419, %v527
  %v529 = vpop.f32.mrb[0].mxu0
  %v530 = vpop.f32.mrb[0].mxu0
  %v531 = vadd.f32 %v419, %v530
  %v532 = vpop.f32.mrb[0].mxu0
  %533 = vmatprep.mubr.bf16.mxu0 0
  %534 = vmatmul.mubr.bf16.gmra.mrb[0].mxu0 %v394
  %v535 = vpop.f32.mrb[0].mxu0
  %v536 = vadd.f32 %v419, %v535
  %v537 = vpop.f32.mrb[0].mxu0
  %v538 = vpop.f32.mrb[0].mxu0
  %v539 = vadd.f32 %v419, %v538
  %v540 = vpop.f32.mrb[0].mxu0
  %541 = vmatprep.mubr.bf16.mxu0 0
  %542 = vmatmul.mubr.bf16.gmra.mrb[0].mxu0 %v395
  %v543 = vpop.f32.mrb[0].mxu0
  %v544 = vadd.f32 %v419, %v543
  %v545 = vpop.f32.mrb[0].mxu0
  %v546 = vpop.f32.mrb[0].mxu0
  %v547 = vadd.f32 %v419, %v546
  %v548 = vpop.f32.mrb[0].mxu0
  %549 = vmatprep.mubr.bf16.mxu0 0
  %550 = vmatmul.mubr.bf16.gmra.mrb[0].mxu0 %v396
  %v551 = vpop.f32.mrb[0].mxu0
  %v552 = vadd.f32 %v419, %v551
  %v553 = vpop.f32.mrb[0].mxu0
  %v554 = vpop.f32.mrb[0].mxu0
  %v555 = vadd.f32 %v419, %v554
  %v556 = vpop.f32.mrb[0].mxu0
  %557 = vmatprep.mubr.bf16.mxu0 0
  %558 = vmatmul.mubr.bf16.gmra.mrb[0].mxu0 %v397
  %v559 = vpop.f32.mrb[0].mxu0
  %v560 = vadd.f32 %v419, %v559
  %v561 = vpop.f32.mrb[0].mxu0
  %v562 = vpop.f32.mrb[0].mxu0
  %v563 = vadd.f32 %v419, %v562
  %v564 = vpop.f32.mrb[0].mxu0
  %565 = vdwg.mxu0
  %v566 = vmax.f32 %v504, 0.0
  %v567 = vmax.f32 %v507, 0.0
  %v568 = vmax.f32 %v512, 0.0
  %v569 = vmax.f32 %v515, 0.0
  %v570 = vmax.f32 %v520, 0.0
  %v571 = vmax.f32 %v523, 0.0
  %v572 = vmax.f32 %v528, 0.0
  %v573 = vmax.f32 %v531, 0.0
  %v574 = vmax.f32 %v536, 0.0
  %v575 = vmax.f32 %v539, 0.0
  %v576 = vmax.f32 %v544, 0.0
  %v577 = vmax.f32 %v547, 0.0
  %v578 = vmax.f32 %v552, 0.0
  %v579 = vmax.f32 %v555, 0.0
  %v580 = vmax.f32 %v560, 0.0
  %v581 = vmax.f32 %v563, 0.0
  %v582 = vpack.c.bf16 %v567, %v566
  %v583 = vpack.c.bf16 %v569, %v568
  %v584 = vpack.c.bf16 %v571, %v570
  %v585 = vpack.c.bf16 %v573, %v572
  %v586 = vpack.c.bf16 %v575, %v574
  %v587 = vpack.c.bf16 %v577, %v576
  %v588 = vpack.c.bf16 %v579, %v578
  %v589 = vpack.c.bf16 %v581, %v580
  %590 = vmatprep.subr.bf16.mxu0 0
  %591 = vmatpush1.bf16.msra.mxu0 %v582
  %592 = vmatprep.subr.bf16.mxu0 0
  %593 = vmatpush1.bf16.msra.mxu0 %v583
  %594 = vmatprep.subr.bf16.mxu0 0
  %595 = vmatpush1.bf16.msra.mxu0 %v584
  %596 = vmatprep.subr.bf16.mxu0 0
  %597 = vmatpush1.bf16.msra.mxu0 %v585
  %598 = vmatprep.subr.bf16.mxu0 0
  %599 = vmatpush1.bf16.msra.mxu0 %v586
  %600 = vmatprep.subr.bf16.mxu0 0
  %601 = vmatpush1.bf16.msra.mxu0 %v587
  %602 = vmatprep.subr.bf16.mxu0 0
  %603 = vmatpush1.bf16.msra.mxu0 %v588
  %604 = vmatprep.subr.bf16.mxu0 0
  %605 = vmatpush1.bf16.msra.mxu0 %v589
  %606 = vmatprep.subr.bf16.mxu0 0
  %607 = vmatpush1.bf16.msra.mxu0 0
  %608 = vmatprep.subr.bf16.mxu0 0
  %609 = vmatpush1.bf16.msra.mxu0 0
  %610 = vmatprep.subr.bf16.mxu0 0
  %611 = vmatpush1.bf16.msra.mxu0 0
  %612 = vmatprep.subr.bf16.mxu0 0
  %613 = vmatpush1.bf16.msra.mxu0 0
  %614 = vmatprep.subr.bf16.mxu0 0
  %615 = vmatpush1.bf16.msra.mxu0 0
  %616 = vmatprep.subr.bf16.mxu0 0
  %617 = vmatpush1.bf16.msra.mxu0 0
  %618 = vmatprep.subr.bf16.mxu0 0
  %619 = vmatpush1.bf16.msra.mxu0 0
  %620 = vmatprep.subr.bf16.mxu0 0
  %621 = vmatpush1.bf16.msra.mxu0 0
  %622 = vmatprep.mubr.bf16.mxu0 0
  %623 = vmatmul.mubr.bf16.gmra.mrb[0].mxu0 %v101
  %v624 = vpop.f32.mrb[0].mxu0
  %v625 = vadd.f32 0.0, %v624
  %v626 = vpop.f32.mrb[0].mxu0
  %v627 = vpop.f32.mrb[0].mxu0
  %v628 = vadd.f32 0.0, %v627
  %v629 = vpop.f32.mrb[0].mxu0
  %630 = vmatprep.mubr.bf16.mxu0 0
  %631 = vmatmul.mubr.bf16.gmra.mrb[0].mxu0 %v102
  %v632 = vpop.f32.mrb[0].mxu0
  %v633 = vadd.f32 0.0, %v632
  %v634 = vpop.f32.mrb[0].mxu0
  %v635 = vpop.f32.mrb[0].mxu0
  %v636 = vadd.f32 0.0, %v635
  %v637 = vpop.f32.mrb[0].mxu0
  %638 = vmatprep.mubr.bf16.mxu0 0
  %639 = vmatmul.mubr.bf16.gmra.mrb[0].mxu0 %v103
  %v640 = vpop.f32.mrb[0].mxu0
  %v641 = vadd.f32 0.0, %v640
  %v642 = vpop.f32.mrb[0].mxu0
  %v643 = vpop.f32.mrb[0].mxu0
  %v644 = vadd.f32 0.0, %v643
  %v645 = vpop.f32.mrb[0].mxu0
  %646 = vmatprep.mubr.bf16.mxu0 0
  %647 = vmatmul.mubr.bf16.gmra.mrb[0].mxu0 %v104
  %v648 = vpop.f32.mrb[0].mxu0
  %v649 = vadd.f32 0.0, %v648
  %v650 = vpop.f32.mrb[0].mxu0
  %v651 = vpop.f32.mrb[0].mxu0
  %v652 = vadd.f32 0.0, %v651
  %v653 = vpop.f32.mrb[0].mxu0
  %654 = vmatprep.mubr.bf16.mxu0 0
  %655 = vmatmul.mubr.bf16.gmra.mrb[0].mxu0 %v105
  %v656 = vpop.f32.mrb[0].mxu0
  %v657 = vadd.f32 0.0, %v656
  %v658 = vpop.f32.mrb[0].mxu0
  %v659 = vpop.f32.mrb[0].mxu0
  %v660 = vadd.f32 0.0, %v659
  %v661 = vpop.f32.mrb[0].mxu0
  %662 = vmatprep.mubr.bf16.mxu0 0
  %663 = vmatmul.mubr.bf16.gmra.mrb[0].mxu0 %v106
  %v664 = vpop.f32.mrb[0].mxu0
  %v665 = vadd.f32 0.0, %v664
  %v666 = vpop.f32.mrb[0].mxu0
  %v667 = vpop.f32.mrb[0].mxu0
  %v668 = vadd.f32 0.0, %v667
  %v669 = vpop.f32.mrb[0].mxu0
  %670 = vmatprep.mubr.bf16.mxu0 0
  %671 = vmatmul.mubr.bf16.gmra.mrb[0].mxu0 %v107
  %v672 = vpop.f32.mrb[0].mxu0
  %v673 = vadd.f32 0.0, %v672
  %v674 = vpop.f32.mrb[0].mxu0
  %v675 = vpop.f32.mrb[0].mxu0
  %v676 = vadd.f32 0.0, %v675
  %v677 = vpop.f32.mrb[0].mxu0
  %678 = vmatprep.mubr.bf16.mxu0 0
  %679 = vmatmul.mubr.bf16.gmra.mrb[0].mxu0 %v108
  %v680 = vpop.f32.mrb[0].mxu0
  %v681 = vadd.f32 0.0, %v680
  %v682 = vpop.f32.mrb[0].mxu0
  %v683 = vpop.f32.mrb[0].mxu0
  %v684 = vadd.f32 0.0, %v683
  %v685 = vpop.f32.mrb[0].mxu0
  %686 = vdwg.mxu0
  %v687 = vmul.f32 %v625, %v265
  %v688 = vmul.f32 %v628, %v270
  %v689 = vmul.f32 %v633, %v275
  %v690 = vmul.f32 %v636, %v280
  %v691 = vmul.f32 %v641, %v285
  %v692 = vmul.f32 %v644, %v290
  %v693 = vmul.f32 %v649, %v295
  %v694 = vmul.f32 %v652, %v300
  %v695 = vmul.f32 %v657, %v305
  %v696 = vmul.f32 %v660, %v310
  %v697 = vmul.f32 %v665, %v315
  %v698 = vmul.f32 %v668, %v320
  %v699 = vmul.f32 %v673, %v325
  %v700 = vmul.f32 %v676, %v330
  %v701 = vmul.f32 %v681, %v335
  %v702 = vmul.f32 %v684, %v340
  %v703 = vunpack.c.l.bf16 %v582
  %v704 = vunpack.c.h.bf16 %v582
  %v705 = vunpack.c.l.bf16 %v583
  %v706 = vunpack.c.h.bf16 %v583
  %v707 = vunpack.c.l.bf16 %v584
  %v708 = vunpack.c.h.bf16 %v584
  %v709 = vunpack.c.l.bf16 %v585
  %v710 = vunpack.c.h.bf16 %v585
  %v711 = vunpack.c.l.bf16 %v586
  %v712 = vunpack.c.h.bf16 %v586
  %v713 = vunpack.c.l.bf16 %v587
  %v714 = vunpack.c.h.bf16 %v587
  %v715 = vunpack.c.l.bf16 %v588
  %v716 = vunpack.c.h.bf16 %v588
  %v717 = vunpack.c.l.bf16 %v589
  %v718 = vunpack.c.h.bf16 %v589
  %v719 = vadd.f32 %v703, %v687
  %v720 = vadd.f32 %v704, %v688
  %v721 = vadd.f32 %v705, %v689
  %v722 = vadd.f32 %v706, %v690
  %v723 = vadd.f32 %v707, %v691
  %v724 = vadd.f32 %v708, %v692
  %v725 = vadd.f32 %v709, %v693
  %v726 = vadd.f32 %v710, %v694
  %v727 = vadd.f32 %v711, %v695
  %v728 = vadd.f32 %v712, %v696
  %v729 = vadd.f32 %v713, %v697
  %v730 = vadd.f32 %v714, %v698
  %v731 = vadd.f32 %v715, %v699
  %v732 = vadd.f32 %v716, %v700
  %v733 = vadd.f32 %v717, %v701
  %v734 = vadd.f32 %v718, %v702
  %v735 = vpack.c.bf16 %v720, %v719
  %v736 = vpack.c.bf16 %v722, %v721
  %v737 = vpack.c.bf16 %v724, %v723
  %v738 = vpack.c.bf16 %v726, %v725
  %v739 = vpack.c.bf16 %v728, %v727
  %v740 = vpack.c.bf16 %v730, %v729
  %v741 = vpack.c.bf16 %v732, %v731
  %v742 = vpack.c.bf16 %v734, %v733
  %s743 = scalar_lea.vmem %s3, 64
  %v744 = vld [vmem:[%s743] sm:$0xf]
  %v745 = vld [vmem:[%s743 + $0x4] sm:$0xf]
  %v746 = vld [vmem:[%s743 + $0x8] sm:$0xf]
  %v747 = vld [vmem:[%s743 + $0xc] sm:$0xf]
  %v748 = vld [vmem:[%s743 + $0x10] sm:$0xf]
  %v749 = vld [vmem:[%s743 + $0x14] sm:$0xf]
  %v750 = vld [vmem:[%s743 + $0x18] sm:$0xf]
  %v751 = vld [vmem:[%s743 + $0x1c] sm:$0xf]
  %v752 = vld [vmem:[%s743 + $0x20] sm:$0xf]
  %v753 = vld [vmem:[%s743 + $0x24] sm:$0xf]
  %v754 = vld [vmem:[%s743 + $0x28] sm:$0xf]
  %v755 = vld [vmem:[%s743 + $0x2c] sm:$0xf]
  %v756 = vld [vmem:[%s743 + $0x30] sm:$0xf]
  %v757 = vld [vmem:[%s743 + $0x34] sm:$0xf]
  %v758 = vld [vmem:[%s743 + $0x38] sm:$0xf]
  %v759 = vld [vmem:[%s743 + $0x3c] sm:$0xf]
  %s760 = scalar_lea.vmem %s4, 1
  %v761 = vld [vmem:[%s760] sm:$0x1]
  %v763 = vlaneseq
  %v764 = vshrl.u32 %v763, 7
  %v765 = vsub.s32 0, %v764
  %v766 = vrot.slane %v761, %v765
  %v784 = vunpack.c.l.b16 %v744
  %v785 = vunpack.c.l.b16 %v745
  %v786 = vunpack.c.l.b16 %v746
  %v787 = vunpack.c.l.b16 %v747
  %v788 = vunpack.c.l.b16 %v748
  %v789 = vunpack.c.l.b16 %v749
  %v790 = vunpack.c.l.b16 %v750
  %v791 = vunpack.c.l.b16 %v751
  %v792 = vunpack.c.l.b16 %v752
  %v793 = vunpack.c.l.b16 %v753
  %v794 = vunpack.c.l.b16 %v754
  %v795 = vunpack.c.l.b16 %v755
  %v796 = vunpack.c.l.b16 %v756
  %v797 = vunpack.c.l.b16 %v757
  %v798 = vunpack.c.l.b16 %v758
  %v799 = vunpack.c.l.b16 %v759
  %v800 = vpack.c.b16 %v785, %v784
  %v801 = vpack.c.b16 %v787, %v786
  %v802 = vpack.c.b16 %v789, %v788
  %v803 = vpack.c.b16 %v791, %v790
  %v804 = vpack.c.b16 %v793, %v792
  %v805 = vpack.c.b16 %v795, %v794
  %v806 = vpack.c.b16 %v797, %v796
  %v807 = vpack.c.b16 %v799, %v798
  %816 = vmatprep.subr.bf16.mxu0 0
  %817 = vmatpush1.bf16.msra.mxu0 %v800
  %818 = vmatprep.subr.bf16.mxu0 0
  %819 = vmatpush1.bf16.msra.mxu0 %v801
  %820 = vmatprep.subr.bf16.mxu0 0
  %821 = vmatpush1.bf16.msra.mxu0 %v802
  %822 = vmatprep.subr.bf16.mxu0 0
  %823 = vmatpush1.bf16.msra.mxu0 %v803
  %824 = vmatprep.subr.bf16.mxu0 0
  %825 = vmatpush1.bf16.msra.mxu0 %v804
  %826 = vmatprep.subr.bf16.mxu0 0
  %827 = vmatpush1.bf16.msra.mxu0 %v805
  %828 = vmatprep.subr.bf16.mxu0 0
  %829 = vmatpush1.bf16.msra.mxu0 %v806
  %830 = vmatprep.subr.bf16.mxu0 0
  %831 = vmatpush1.bf16.msra.mxu0 %v807
  %832 = vmatprep.subr.bf16.mxu0 0
  %833 = vmatpush1.bf16.msra.mxu0 0
  %834 = vmatprep.subr.bf16.mxu0 0
  %835 = vmatpush1.bf16.msra.mxu0 0
  %836 = vmatprep.subr.bf16.mxu0 0
  %837 = vmatpush1.bf16.msra.mxu0 0
  %838 = vmatprep.subr.bf16.mxu0 0
  %839 = vmatpush1.bf16.msra.mxu0 0
  %840 = vmatprep.subr.bf16.mxu0 0
  %841 = vmatpush1.bf16.msra.mxu0 0
  %842 = vmatprep.subr.bf16.mxu0 0
  %843 = vmatpush1.bf16.msra.mxu0 0
  %844 = vmatprep.subr.bf16.mxu0 0
  %845 = vmatpush1.bf16.msra.mxu0 0
  %846 = vmatprep.subr.bf16.mxu0 0
  %847 = vmatpush1.bf16.msra.mxu0 0
  %848 = vmatprep.mubr.bf16.mxu0 0
  %849 = vmatmul.mubr.bf16.gmra.mrb[0].mxu0 %v735
  %v850 = vpop.f32.mrb[0].mxu0
  %v851 = vadd.f32 %v766, %v850
  %v852 = vpop.f32.mrb[0].mxu0
  %v853 = vpop.f32.mrb[0].mxu0
  %v854 = vadd.f32 %v766, %v853
  %v855 = vpop.f32.mrb[0].mxu0
  %856 = vmatprep.mubr.bf16.mxu0 0
  %857 = vmatmul.mubr.bf16.gmra.mrb[0].mxu0 %v736
  %v858 = vpop.f32.mrb[0].mxu0
  %v859 = vadd.f32 %v766, %v858
  %v860 = vpop.f32.mrb[0].mxu0
  %v861 = vpop.f32.mrb[0].mxu0
  %v862 = vadd.f32 %v766, %v861
  %v863 = vpop.f32.mrb[0].mxu0
  %864 = vmatprep.mubr.bf16.mxu0 0
  %865 = vmatmul.mubr.bf16.gmra.mrb[0].mxu0 %v737
  %v866 = vpop.f32.mrb[0].mxu0
  %v867 = vadd.f32 %v766, %v866
  %v868 = vpop.f32.mrb[0].mxu0
  %v869 = vpop.f32.mrb[0].mxu0
  %v870 = vadd.f32 %v766, %v869
  %v871 = vpop.f32.mrb[0].mxu0
  %872 = vmatprep.mubr.bf16.mxu0 0
  %873 = vmatmul.mubr.bf16.gmra.mrb[0].mxu0 %v738
  %v874 = vpop.f32.mrb[0].mxu0
  %v875 = vadd.f32 %v766, %v874
  %v876 = vpop.f32.mrb[0].mxu0
  %v877 = vpop.f32.mrb[0].mxu0
  %v878 = vadd.f32 %v766, %v877
  %v879 = vpop.f32.mrb[0].mxu0
  %880 = vmatprep.mubr.bf16.mxu0 0
  %881 = vmatmul.mubr.bf16.gmra.mrb[0].mxu0 %v739
  %v882 = vpop.f32.mrb[0].mxu0
  %v883 = vadd.f32 %v766, %v882
  %v884 = vpop.f32.mrb[0].mxu0
  %v885 = vpop.f32.mrb[0].mxu0
  %v886 = vadd.f32 %v766, %v885
  %v887 = vpop.f32.mrb[0].mxu0
  %888 = vmatprep.mubr.bf16.mxu0 0
  %889 = vmatmul.mubr.bf16.gmra.mrb[0].mxu0 %v740
  %v890 = vpop.f32.mrb[0].mxu0
  %v891 = vadd.f32 %v766, %v890
  %v892 = vpop.f32.mrb[0].mxu0
  %v893 = vpop.f32.mrb[0].mxu0
  %v894 = vadd.f32 %v766, %v893
  %v895 = vpop.f32.mrb[0].mxu0
  %896 = vmatprep.mubr.bf16.mxu0 0
  %897 = vmatmul.mubr.bf16.gmra.mrb[0].mxu0 %v741
  %v898 = vpop.f32.mrb[0].mxu0
  %v899 = vadd.f32 %v766, %v898
  %v900 = vpop.f32.mrb[0].mxu0
  %v901 = vpop.f32.mrb[0].mxu0
  %v902 = vadd.f32 %v766, %v901
  %v903 = vpop.f32.mrb[0].mxu0
  %904 = vmatprep.mubr.bf16.mxu0 0
  %905 = vmatmul.mubr.bf16.gmra.mrb[0].mxu0 %v742
  %v906 = vpop.f32.mrb[0].mxu0
  %v907 = vadd.f32 %v766, %v906
  %v908 = vpop.f32.mrb[0].mxu0
  %v909 = vpop.f32.mrb[0].mxu0
  %v910 = vadd.f32 %v766, %v909
  %v911 = vpop.f32.mrb[0].mxu0
  %912 = vdwg.mxu0
  %v913 = vmax.f32 %v851, 0.0
  %v914 = vmax.f32 %v854, 0.0
  %v915 = vmax.f32 %v859, 0.0
  %v916 = vmax.f32 %v862, 0.0
  %v917 = vmax.f32 %v867, 0.0
  %v918 = vmax.f32 %v870, 0.0
  %v919 = vmax.f32 %v875, 0.0
  %v920 = vmax.f32 %v878, 0.0
  %v921 = vmax.f32 %v883, 0.0
  %v922 = vmax.f32 %v886, 0.0
  %v923 = vmax.f32 %v891, 0.0
  %v924 = vmax.f32 %v894, 0.0
  %v925 = vmax.f32 %v899, 0.0
  %v926 = vmax.f32 %v902, 0.0
  %v927 = vmax.f32 %v907, 0.0
  %v928 = vmax.f32 %v910, 0.0
  %v929 = vpack.c.bf16 %v914, %v913
  %v930 = vpack.c.bf16 %v916, %v915
  %v931 = vpack.c.bf16 %v918, %v917
  %v932 = vpack.c.bf16 %v920, %v919
  %v933 = vpack.c.bf16 %v922, %v921
  %v934 = vpack.c.bf16 %v924, %v923
  %v935 = vpack.c.bf16 %v926, %v925
  %v936 = vpack.c.bf16 %v928, %v927
  %937 = vmatprep.subr.bf16.mxu0 0
  %938 = vmatpush1.bf16.msra.mxu0 %v929
  %939 = vmatprep.subr.bf16.mxu0 0
  %940 = vmatpush1.bf16.msra.mxu0 %v930
  %941 = vmatprep.subr.bf16.mxu0 0
  %942 = vmatpush1.bf16.msra.mxu0 %v931
  %943 = vmatprep.subr.bf16.mxu0 0
  %944 = vmatpush1.bf16.msra.mxu0 %v932
  %945 = vmatprep.subr.bf16.mxu0 0
  %946 = vmatpush1.bf16.msra.mxu0 %v933
  %947 = vmatprep.subr.bf16.mxu0 0
  %948 = vmatpush1.bf16.msra.mxu0 %v934
  %949 = vmatprep.subr.bf16.mxu0 0
  %950 = vmatpush1.bf16.msra.mxu0 %v935
  %951 = vmatprep.subr.bf16.mxu0 0
  %952 = vmatpush1.bf16.msra.mxu0 %v936
  %953 = vmatprep.subr.bf16.mxu0 0
  %954 = vmatpush1.bf16.msra.mxu0 0
  %955 = vmatprep.subr.bf16.mxu0 0
  %956 = vmatpush1.bf16.msra.mxu0 0
  %957 = vmatprep.subr.bf16.mxu0 0
  %958 = vmatpush1.bf16.msra.mxu0 0
  %959 = vmatprep.subr.bf16.mxu0 0
  %960 = vmatpush1.bf16.msra.mxu0 0
  %961 = vmatprep.subr.bf16.mxu0 0
  %962 = vmatpush1.bf16.msra.mxu0 0
  %963 = vmatprep.subr.bf16.mxu0 0
  %964 = vmatpush1.bf16.msra.mxu0 0
  %965 = vmatprep.subr.bf16.mxu0 0
  %966 = vmatpush1.bf16.msra.mxu0 0
  %967 = vmatprep.subr.bf16.mxu0 0
  %968 = vmatpush1.bf16.msra.mxu0 0
  %969 = vmatprep.mubr.bf16.mxu0 0
  %970 = vmatmul.mubr.bf16.gmra.mrb[0].mxu0 %v101
  %v971 = vpop.f32.mrb[0].mxu0
  %v972 = vadd.f32 0.0, %v971
  %v973 = vpop.f32.mrb[0].mxu0
  %v974 = vpop.f32.mrb[0].mxu0
  %v975 = vadd.f32 0.0, %v974
  %v976 = vpop.f32.mrb[0].mxu0
  %977 = vmatprep.mubr.bf16.mxu0 0
  %978 = vmatmul.mubr.bf16.gmra.mrb[0].mxu0 %v102
  %v979 = vpop.f32.mrb[0].mxu0
  %v980 = vadd.f32 0.0, %v979
  %v981 = vpop.f32.mrb[0].mxu0
  %v982 = vpop.f32.mrb[0].mxu0
  %v983 = vadd.f32 0.0, %v982
  %v984 = vpop.f32.mrb[0].mxu0
  %985 = vmatprep.mubr.bf16.mxu0 0
  %986 = vmatmul.mubr.bf16.gmra.mrb[0].mxu0 %v103
  %v987 = vpop.f32.mrb[0].mxu0
  %v988 = vadd.f32 0.0, %v987
  %v989 = vpop.f32.mrb[0].mxu0
  %v990 = vpop.f32.mrb[0].mxu0
  %v991 = vadd.f32 0.0, %v990
  %v992 = vpop.f32.mrb[0].mxu0
  %993 = vmatprep.mubr.bf16.mxu0 0
  %994 = vmatmul.mubr.bf16.gmra.mrb[0].mxu0 %v104
  %v995 = vpop.f32.mrb[0].mxu0
  %v996 = vadd.f32 0.0, %v995
  %v997 = vpop.f32.mrb[0].mxu0
  %v998 = vpop.f32.mrb[0].mxu0
  %v999 = vadd.f32 0.0, %v998
  %v1000 = vpop.f32.mrb[0].mxu0
  %1001 = vmatprep.mubr.bf16.mxu0 0
  %1002 = vmatmul.mubr.bf16.gmra.mrb[0].mxu0 %v105
  %v1003 = vpop.f32.mrb[0].mxu0
  %v1004 = vadd.f32 0.0, %v1003
  %v1005 = vpop.f32.mrb[0].mxu0
  %v1006 = vpop.f32.mrb[0].mxu0
  %v1007 = vadd.f32 0.0, %v1006
  %v1008 = vpop.f32.mrb[0].mxu0
  %1009 = vmatprep.mubr.bf16.mxu0 0
  %1010 = vmatmul.mubr.bf16.gmra.mrb[0].mxu0 %v106
  %v1011 = vpop.f32.mrb[0].mxu0
  %v1012 = vadd.f32 0.0, %v1011
  %v1013 = vpop.f32.mrb[0].mxu0
  %v1014 = vpop.f32.mrb[0].mxu0
  %v1015 = vadd.f32 0.0, %v1014
  %v1016 = vpop.f32.mrb[0].mxu0
  %1017 = vmatprep.mubr.bf16.mxu0 0
  %1018 = vmatmul.mubr.bf16.gmra.mrb[0].mxu0 %v107
  %v1019 = vpop.f32.mrb[0].mxu0
  %v1020 = vadd.f32 0.0, %v1019
  %v1021 = vpop.f32.mrb[0].mxu0
  %v1022 = vpop.f32.mrb[0].mxu0
  %v1023 = vadd.f32 0.0, %v1022
  %v1024 = vpop.f32.mrb[0].mxu0
  %1025 = vmatprep.mubr.bf16.mxu0 0
  %1026 = vmatmul.mubr.bf16.gmra.mrb[0].mxu0 %v108
  %v1027 = vpop.f32.mrb[0].mxu0
  %v1028 = vadd.f32 0.0, %v1027
  %v1029 = vpop.f32.mrb[0].mxu0
  %v1030 = vpop.f32.mrb[0].mxu0
  %v1031 = vadd.f32 0.0, %v1030
  %v1032 = vpop.f32.mrb[0].mxu0
  %1033 = vdwg.mxu0
  %v1034 = vmul.f32 %v972, %v265
  %v1035 = vmul.f32 %v975, %v270
  %v1036 = vmul.f32 %v980, %v275
  %v1037 = vmul.f32 %v983, %v280
  %v1038 = vmul.f32 %v988, %v285
  %v1039 = vmul.f32 %v991, %v290
  %v1040 = vmul.f32 %v996, %v295
  %v1041 = vmul.f32 %v999, %v300
  %v1042 = vmul.f32 %v1004, %v305
  %v1043 = vmul.f32 %v1007, %v310
  %v1044 = vmul.f32 %v1012, %v315
  %v1045 = vmul.f32 %v1015, %v320
  %v1046 = vmul.f32 %v1020, %v325
  %v1047 = vmul.f32 %v1023, %v330
  %v1048 = vmul.f32 %v1028, %v335
  %v1049 = vmul.f32 %v1031, %v340
  %v1050 = vunpack.c.l.bf16 %v929
  %v1051 = vunpack.c.h.bf16 %v929
  %v1052 = vunpack.c.l.bf16 %v930
  %v1053 = vunpack.c.h.bf16 %v930
  %v1054 = vunpack.c.l.bf16 %v931
  %v1055 = vunpack.c.h.bf16 %v931
  %v1056 = vunpack.c.l.bf16 %v932
  %v1057 = vunpack.c.h.bf16 %v932
  %v1058 = vunpack.c.l.bf16 %v933
  %v1059 = vunpack.c.h.bf16 %v933
  %v1060 = vunpack.c.l.bf16 %v934
  %v1061 = vunpack.c.h.bf16 %v934
  %v1062 = vunpack.c.l.bf16 %v935
  %v1063 = vunpack.c.h.bf16 %v935
  %v1064 = vunpack.c.l.bf16 %v936
  %v1065 = vunpack.c.h.bf16 %v936
  %v1066 = vadd.f32 %v1050, %v1034
  %v1067 = vadd.f32 %v1051, %v1035
  %v1068 = vadd.f32 %v1052, %v1036
  %v1069 = vadd.f32 %v1053, %v1037
  %v1070 = vadd.f32 %v1054, %v1038
  %v1071 = vadd.f32 %v1055, %v1039
  %v1072 = vadd.f32 %v1056, %v1040
  %v1073 = vadd.f32 %v1057, %v1041
  %v1074 = vadd.f32 %v1058, %v1042
  %v1075 = vadd.f32 %v1059, %v1043
  %v1076 = vadd.f32 %v1060, %v1044
  %v1077 = vadd.f32 %v1061, %v1045
  %v1078 = vadd.f32 %v1062, %v1046
  %v1079 = vadd.f32 %v1063, %v1047
  %v1080 = vadd.f32 %v1064, %v1048
  %v1081 = vadd.f32 %v1065, %v1049
  %v1082 = vpack.c.bf16 %v1067, %v1066
  %v1083 = vpack.c.bf16 %v1069, %v1068
  %v1084 = vpack.c.bf16 %v1071, %v1070
  %v1085 = vpack.c.bf16 %v1073, %v1072
  %v1086 = vpack.c.bf16 %v1075, %v1074
  %v1087 = vpack.c.bf16 %v1077, %v1076
  %v1088 = vpack.c.bf16 %v1079, %v1078
  %v1089 = vpack.c.bf16 %v1081, %v1080
  %s1090 = scalar_lea.vmem %s3, 128
  %v1091 = vld [vmem:[%s1090] sm:$0xf]
  %v1092 = vld [vmem:[%s1090 + $0x4] sm:$0xf]
  %v1093 = vld [vmem:[%s1090 + $0x8] sm:$0xf]
  %v1094 = vld [vmem:[%s1090 + $0xc] sm:$0xf]
  %v1095 = vld [vmem:[%s1090 + $0x10] sm:$0xf]
  %v1096 = vld [vmem:[%s1090 + $0x14] sm:$0xf]
  %v1097 = vld [vmem:[%s1090 + $0x18] sm:$0xf]
  %v1098 = vld [vmem:[%s1090 + $0x1c] sm:$0xf]
  %v1099 = vld [vmem:[%s1090 + $0x20] sm:$0xf]
  %v1100 = vld [vmem:[%s1090 + $0x24] sm:$0xf]
  %v1101 = vld [vmem:[%s1090 + $0x28] sm:$0xf]
  %v1102 = vld [vmem:[%s1090 + $0x2c] sm:$0xf]
  %v1103 = vld [vmem:[%s1090 + $0x30] sm:$0xf]
  %v1104 = vld [vmem:[%s1090 + $0x34] sm:$0xf]
  %v1105 = vld [vmem:[%s1090 + $0x38] sm:$0xf]
  %v1106 = vld [vmem:[%s1090 + $0x3c] sm:$0xf]
  %s1107 = scalar_lea.vmem %s4, 2
  %v1108 = vld [vmem:[%s1107] sm:$0x1]
  %v1110 = vlaneseq
  %v1111 = vshrl.u32 %v1110, 7
  %v1112 = vsub.s32 0, %v1111
  %v1113 = vrot.slane %v1108, %v1112
  %v1131 = vunpack.c.l.b16 %v1091
  %v1132 = vunpack.c.l.b16 %v1092
  %v1133 = vunpack.c.l.b16 %v1093
  %v1134 = vunpack.c.l.b16 %v1094
  %v1135 = vunpack.c.l.b16 %v1095
  %v1136 = vunpack.c.l.b16 %v1096
  %v1137 = vunpack.c.l.b16 %v1097
  %v1138 = vunpack.c.l.b16 %v1098
  %v1139 = vunpack.c.l.b16 %v1099
  %v1140 = vunpack.c.l.b16 %v1100
  %v1141 = vunpack.c.l.b16 %v1101
  %v1142 = vunpack.c.l.b16 %v1102
  %v1143 = vunpack.c.l.b16 %v1103
  %v1144 = vunpack.c.l.b16 %v1104
  %v1145 = vunpack.c.l.b16 %v1105
  %v1146 = vunpack.c.l.b16 %v1106
  %v1147 = vpack.c.b16 %v1132, %v1131
  %v1148 = vpack.c.b16 %v1134, %v1133
  %v1149 = vpack.c.b16 %v1136, %v1135
  %v1150 = vpack.c.b16 %v1138, %v1137
  %v1151 = vpack.c.b16 %v1140, %v1139
  %v1152 = vpack.c.b16 %v1142, %v1141
  %v1153 = vpack.c.b16 %v1144, %v1143
  %v1154 = vpack.c.b16 %v1146, %v1145
  %1163 = vmatprep.subr.bf16.mxu0 0
  %1164 = vmatpush1.bf16.msra.mxu0 %v1147
  %1165 = vmatprep.subr.bf16.mxu0 0
  %1166 = vmatpush1.bf16.msra.mxu0 %v1148
  %1167 = vmatprep.subr.bf16.mxu0 0
  %1168 = vmatpush1.bf16.msra.mxu0 %v1149
  %1169 = vmatprep.subr.bf16.mxu0 0
  %1170 = vmatpush1.bf16.msra.mxu0 %v1150
  %1171 = vmatprep.subr.bf16.mxu0 0
  %1172 = vmatpush1.bf16.msra.mxu0 %v1151
  %1173 = vmatprep.subr.bf16.mxu0 0
  %1174 = vmatpush1.bf16.msra.mxu0 %v1152
  %1175 = vmatprep.subr.bf16.mxu0 0
  %1176 = vmatpush1.bf16.msra.mxu0 %v1153
  %1177 = vmatprep.subr.bf16.mxu0 0
  %1178 = vmatpush1.bf16.msra.mxu0 %v1154
  %1179 = vmatprep.subr.bf16.mxu0 0
  %1180 = vmatpush1.bf16.msra.mxu0 0
  %1181 = vmatprep.subr.bf16.mxu0 0
  %1182 = vmatpush1.bf16.msra.mxu0 0
  %1183 = vmatprep.subr.bf16.mxu0 0
  %1184 = vmatpush1.bf16.msra.mxu0 0
  %1185 = vmatprep.subr.bf16.mxu0 0
  %1186 = vmatpush1.bf16.msra.mxu0 0
  %1187 = vmatprep.subr.bf16.mxu0 0
  %1188 = vmatpush1.bf16.msra.mxu0 0
  %1189 = vmatprep.subr.bf16.mxu0 0
  %1190 = vmatpush1.bf16.msra.mxu0 0
  %1191 = vmatprep.subr.bf16.mxu0 0
  %1192 = vmatpush1.bf16.msra.mxu0 0
  %1193 = vmatprep.subr.bf16.mxu0 0
  %1194 = vmatpush1.bf16.msra.mxu0 0
  %1195 = vmatprep.mubr.bf16.mxu0 0
  %1196 = vmatmul.mubr.bf16.gmra.mrb[0].mxu0 %v1082
  %v1197 = vpop.f32.mrb[0].mxu0
  %v1198 = vadd.f32 %v1113, %v1197
  %v1199 = vpop.f32.mrb[0].mxu0
  %v1200 = vpop.f32.mrb[0].mxu0
  %v1201 = vadd.f32 %v1113, %v1200
  %v1202 = vpop.f32.mrb[0].mxu0
  %1203 = vmatprep.mubr.bf16.mxu0 0
  %1204 = vmatmul.mubr.bf16.gmra.mrb[0].mxu0 %v1083
  %v1205 = vpop.f32.mrb[0].mxu0
  %v1206 = vadd.f32 %v1113, %v1205
  %v1207 = vpop.f32.mrb[0].mxu0
  %v1208 = vpop.f32.mrb[0].mxu0
  %v1209 = vadd.f32 %v1113, %v1208
  %v1210 = vpop.f32.mrb[0].mxu0
  %1211 = vmatprep.mubr.bf16.mxu0 0
  %1212 = vmatmul.mubr.bf16.gmra.mrb[0].mxu0 %v1084
  %v1213 = vpop.f32.mrb[0].mxu0
  %v1214 = vadd.f32 %v1113, %v1213
  %v1215 = vpop.f32.mrb[0].mxu0
  %v1216 = vpop.f32.mrb[0].mxu0
  %v1217 = vadd.f32 %v1113, %v1216
  %v1218 = vpop.f32.mrb[0].mxu0
  %1219 = vmatprep.mubr.bf16.mxu0 0
  %1220 = vmatmul.mubr.bf16.gmra.mrb[0].mxu0 %v1085
  %v1221 = vpop.f32.mrb[0].mxu0
  %v1222 = vadd.f32 %v1113, %v1221
  %v1223 = vpop.f32.mrb[0].mxu0
  %v1224 = vpop.f32.mrb[0].mxu0
  %v1225 = vadd.f32 %v1113, %v1224
  %v1226 = vpop.f32.mrb[0].mxu0
  %1227 = vmatprep.mubr.bf16.mxu0 0
  %1228 = vmatmul.mubr.bf16.gmra.mrb[0].mxu0 %v1086
  %v1229 = vpop.f32.mrb[0].mxu0
  %v1230 = vadd.f32 %v1113, %v1229
  %v1231 = vpop.f32.mrb[0].mxu0
  %v1232 = vpop.f32.mrb[0].mxu0
  %v1233 = vadd.f32 %v1113, %v1232
  %v1234 = vpop.f32.mrb[0].mxu0
  %1235 = vmatprep.mubr.bf16.mxu0 0
  %1236 = vmatmul.mubr.bf16.gmra.mrb[0].mxu0 %v1087
  %v1237 = vpop.f32.mrb[0].mxu0
  %v1238 = vadd.f32 %v1113, %v1237
  %v1239 = vpop.f32.mrb[0].mxu0
  %v1240 = vpop.f32.mrb[0].mxu0
  %v1241 = vadd.f32 %v1113, %v1240
  %v1242 = vpop.f32.mrb[0].mxu0
  %1243 = vmatprep.mubr.bf16.mxu0 0
  %1244 = vmatmul.mubr.bf16.gmra.mrb[0].mxu0 %v1088
  %v1245 = vpop.f32.mrb[0].mxu0
  %v1246 = vadd.f32 %v1113, %v1245
  %v1247 = vpop.f32.mrb[0].mxu0
  %v1248 = vpop.f32.mrb[0].mxu0
  %v1249 = vadd.f32 %v1113, %v1248
  %v1250 = vpop.f32.mrb[0].mxu0
  %1251 = vmatprep.mubr.bf16.mxu0 0
  %1252 = vmatmul.mubr.bf16.gmra.mrb[0].mxu0 %v1089
  %v1253 = vpop.f32.mrb[0].mxu0
  %v1254 = vadd.f32 %v1113, %v1253
  %v1255 = vpop.f32.mrb[0].mxu0
  %v1256 = vpop.f32.mrb[0].mxu0
  %v1257 = vadd.f32 %v1113, %v1256
  %v1258 = vpop.f32.mrb[0].mxu0
  %1259 = vdwg.mxu0
  %v1260 = vpack.c.bf16 %v1201, %v1198
  %v1261 = vpack.c.bf16 %v1209, %v1206
  %v1262 = vpack.c.bf16 %v1217, %v1214
  %v1263 = vpack.c.bf16 %v1225, %v1222
  %v1264 = vpack.c.bf16 %v1233, %v1230
  %v1265 = vpack.c.bf16 %v1241, %v1238
  %v1266 = vpack.c.bf16 %v1249, %v1246
  %v1267 = vpack.c.bf16 %v1257, %v1254
  %v1268 = vunpack.c.l.bf16 %v1260
  %v1269 = vunpack.c.h.bf16 %v1260
  %v1270 = vunpack.c.l.bf16 %v1261
  %v1271 = vunpack.c.h.bf16 %v1261
  %v1272 = vunpack.c.l.bf16 %v1262
  %v1273 = vunpack.c.h.bf16 %v1262
  %v1274 = vunpack.c.l.bf16 %v1263
  %v1275 = vunpack.c.h.bf16 %v1263
  %v1276 = vunpack.c.l.bf16 %v1264
  %v1277 = vunpack.c.h.bf16 %v1264
  %v1278 = vunpack.c.l.bf16 %v1265
  %v1279 = vunpack.c.h.bf16 %v1265
  %v1280 = vunpack.c.l.bf16 %v1266
  %v1281 = vunpack.c.h.bf16 %v1266
  %v1282 = vunpack.c.l.bf16 %v1267
  %v1283 = vunpack.c.h.bf16 %v1267
  %1284 = vst [vmem:[%s5] sm:$0xff] %v1268
  %1285 = vst [vmem:[%s5 + $0x8] sm:$0xff] %v1269
  %1286 = vst [vmem:[%s5 + $0x10] sm:$0xff] %v1270
  %1287 = vst [vmem:[%s5 + $0x18] sm:$0xff] %v1271
  %1288 = vst [vmem:[%s5 + $0x20] sm:$0xff] %v1272
  %1289 = vst [vmem:[%s5 + $0x28] sm:$0xff] %v1273
  %1290 = vst [vmem:[%s5 + $0x30] sm:$0xff] %v1274
  %1291 = vst [vmem:[%s5 + $0x38] sm:$0xff] %v1275
  %1292 = vst [vmem:[%s5 + $0x40] sm:$0xff] %v1276
  %1293 = vst [vmem:[%s5 + $0x48] sm:$0xff] %v1277
  %1294 = vst [vmem:[%s5 + $0x50] sm:$0xff] %v1278
  %1295 = vst [vmem:[%s5 + $0x58] sm:$0xff] %v1279
  %1296 = vst [vmem:[%s5 + $0x60] sm:$0xff] %v1280
  %1297 = vst [vmem:[%s5 + $0x68] sm:$0xff] %v1281
  %1298 = vst [vmem:[%s5 + $0x70] sm:$0xff] %v1282
  %1299 = vst [vmem:[%s5 + $0x78] sm:$0xff] %v1283
  // Predicated region
  $region22: #{gin_forward.1} parent=0 // pred_check
    _
  $region23: #{gin_forward.1} parent=0 // pred_check_branch
    %1301 = sbr.rel (0) target = $region25
  $region24: #{gin_forward.1} parent=0 // pred_region
    _
  $region25: #{gin_forward.1} parent=0 // pred_fallthru
    _
  // Predicated region
  $region26: #{gin_forward.1} parent=0 // pred_check
    _
  $region27: #{gin_forward.1} parent=0 // pred_check_branch
    %1303 = sbr.rel (0) target = $region29
  $region28: #{gin_forward.1} parent=0 // pred_region
    _
  $region29: #{gin_forward.1} parent=0 // pred_fallthru
    _

</llo_original>
